<compile_context>
chip_gen: v7x
topology: tpu7x:2x2x1
jax: 0.10.0
libtpu: 0.0.40
codegen_flags: <defaults>
</compile_context>

<pallas_src>
import math

import jax
import jax.numpy as jnp
from jax.experimental import pallas as pl
from jax.experimental.pallas import tpu as pltpu

_LANE = 128
_SUBLANE = 8
_TARGET_BLOCK_BYTES = 2 * 1024 * 1024     # ~2 MiB x-block: roofline plateau, VMEM-safe everywhere
_MIN_PALLAS_BYTES = 256 * 1024            # below this, let XLA fuse the add


def _pe_add_kernel(x_ref, pe_ref, o_ref):
    # x_ref: (tb, tl), pe_ref: (1, tl) -> broadcast add over batch rows.
    o_ref[...] = x_ref[...] + pe_ref[...]


def make_sinusoidal_table(seq_len: int, d_model: int) -> jnp.ndarray:
    """Same construction as the torch module's `pe` buffer, shape (seq_len, d_model)."""
    position = jnp.arange(seq_len, dtype=jnp.float32)[:, None]
    div_term = jnp.exp(
        jnp.arange(0, d_model, 2, dtype=jnp.float32) * (-math.log(10000.0) / d_model)
    )
    pe = jnp.zeros((seq_len, d_model), jnp.float32)
    pe = pe.at[:, 0::2].set(jnp.sin(position * div_term))
    pe = pe.at[:, 1::2].set(jnp.cos(position * div_term))
    return pe


def _choose_tiles(B: int, sd_p: int, itemsize: int,
                  target: int = _TARGET_BLOCK_BYTES) -> tuple[int, int]:
    """Pick (tb, tl) so tb*tl*itemsize ~ target, tb in {B, multiple of 8},
    tl a multiple of 128 (sd_p already is)."""
    total = B * sd_p * itemsize
    if total <= target:
        return B, sd_p                                    # single block
    if B <= _SUBLANE:
        tb = B                                            # full batch (== full dim, legal)
        tl = min(sd_p, max(_LANE, (target // (tb * itemsize)) // _LANE * _LANE))
        return tb, tl
    row_bytes = sd_p * itemsize
    if _SUBLANE * row_bytes >= target:
        # even 8 full rows exceed the budget -> minimal sublane-dense tb, tile lanes
        tb = _SUBLANE
        tl = min(sd_p, max(_LANE, (target // (tb * itemsize)) // _LANE * _LANE))
        return tb, tl
    # full rows fit -> tile the batch in multiples of 8
    tl = sd_p
    tb = (target // row_bytes) // _SUBLANE * _SUBLANE
    tb = max(_SUBLANE, min(tb, (B // _SUBLANE) * _SUBLANE))
    return tb, tl


def positional_encoding_forward(x: jnp.ndarray, pe: jnp.ndarray, *,
                                min_pallas_bytes: int = _MIN_PALLAS_BYTES) -> jnp.ndarray:
    """x: (B, S, D), pe: (seq_len >= S, D)  ->  (B, S, D) = x + pe[:S][None]."""
    B, S, D = x.shape
    assert pe.shape[0] >= S and pe.shape[1] == D
    itemsize = jnp.dtype(x.dtype).itemsize
    pe_s = pe[:S].astype(x.dtype)

    if B * S * D * itemsize < min_pallas_bytes:
        # Tiny input: pallas launch overhead dwarfs the add; XLA fuses this for free.
        return x + pe_s[None]

    sd = S * D
    pad = (-sd) % _LANE                                   # keep last dim lane-dense
    sd_p = sd + pad
    x2 = x.reshape(B, sd)
    pe2 = pe_s.reshape(1, sd)
    if pad:
        x2 = jnp.pad(x2, ((0, 0), (0, pad)))
        pe2 = jnp.pad(pe2, ((0, 0), (0, pad)))

    tb, tl = _choose_tiles(B, sd_p, itemsize)
    grid = (pl.cdiv(B, tb), pl.cdiv(sd_p, tl))

    # 2x double-buffered x + 2x double-buffered out + 2x pe block + slack.
    vmem_bytes = int(2 * (2 * tb * tl + 2 * tl) * itemsize + (4 << 20))
    vmem_bytes = max(vmem_bytes, 16 << 20)

    out = pl.pallas_call(
        _pe_add_kernel,
        out_shape=jax.ShapeDtypeStruct((B, sd_p), x.dtype),
        grid=grid,
        in_specs=[
            pl.BlockSpec((tb, tl), lambda b, l: (b, l)),   # x tile
            pl.BlockSpec((1, tl), lambda b, l: (0, l)),    # pe tile (broadcast over batch)
        ],
        out_specs=pl.BlockSpec((tb, tl), lambda b, l: (b, l)),
        input_output_aliases={0: 0},                       # in-place add over x's slab
        compiler_params=pltpu.CompilerParams(
            dimension_semantics=("parallel", "parallel"),
            vmem_limit_bytes=vmem_bytes,
        ),
    )(x2, pe2)

    if pad:
        out = out[:, :sd]
    return out.reshape(B, S, D)


def positional_encoding_reference(x: jnp.ndarray, pe: jnp.ndarray) -> jnp.ndarray:
    """Pure-JAX reference mirroring the PyTorch module (dropout = identity)."""
    return x + pe[None, : x.shape[1], :]


if __name__ == "__main__":
    # Shapes consistent with the module: batch=2, seq=8, d_model=32, pe built
    # for seq_len=16 (longer than the input, exercising the pe[:, :S, :] slice).
    B, S, D, SEQ_LEN = 2, 8, 32, 16
    key = jax.random.PRNGKey(0)
    x = jax.random.normal(key, (B, S, D), jnp.float32)
    pe = make_sinusoidal_table(SEQ_LEN, D)

    # min_pallas_bytes=0 forces the Pallas path even at this tiny test shape.
    out = jax.block_until_ready(positional_encoding_forward(x, pe, min_pallas_bytes=0))
    assert out.shape == (B, S, D)
    assert jnp.max(jnp.abs(out - positional_encoding_reference(x, pe))) < 1e-6

    # Larger check: exercises the byte-budgeted batch-tiled grid (tb=8, 2 steps).
    xb = jax.random.normal(jax.random.PRNGKey(0), (16, 256, 160), jnp.float32)
    peb = make_sinusoidal_table(256, 160)
    outb = jax.block_until_ready(positional_encoding_forward(xb, peb, min_pallas_bytes=0))
    assert jnp.max(jnp.abs(outb - positional_encoding_reference(xb, peb))) < 1e-6

    # Non-128-multiple S*D: exercises the lane-padding path.
    xc = jax.random.normal(jax.random.PRNGKey(0), (4, 100, 50), jnp.float32)
    pec = make_sinusoidal_table(128, 50)
    outc = jax.block_until_ready(positional_encoding_forward(xc, pec, min_pallas_bytes=0))
    assert jnp.max(jnp.abs(outc - positional_encoding_reference(xc, pec))) < 1e-6

    print("KERNEL_OK")
</pallas_src>

<mosaic_0001>
module attributes {stable_mosaic.version = 11 : i64} {
  func.func @_pe_add_kernel(%arg0: i32, %arg1: i32, %arg2: memref<2x256xf32, #tpu.memory_space<vmem>>, %arg3: memref<1x256xf32, #tpu.memory_space<vmem>>, %arg4: memref<2x256xf32, #tpu.memory_space<vmem>>) attributes {dimension_semantics = [#tpu.dimension_semantics<parallel>, #tpu.dimension_semantics<parallel>], iteration_bounds = array<i64: 1, 1>, scalar_prefetch = 0 : i64, scratch_operands = 0 : i64, tpu.core_type = #tpu.core_type<tc>, window_params = [{transform_indices = @transform_0, window_bounds = array<i64: 2, 256>}, {transform_indices = @transform_1, window_bounds = array<i64: 1, 256>}, {transform_indices = @transform_2, window_bounds = array<i64: 2, 256>}]} {
    %c0 = arith.constant 0 : index
    %c0_0 = arith.constant 0 : index
    %0 = vector.load %arg2[%c0, %c0_0] : memref<2x256xf32, #tpu.memory_space<vmem>>, vector<2x256xf32>
    %c0_1 = arith.constant 0 : index
    %c0_2 = arith.constant 0 : index
    %1 = vector.load %arg3[%c0_1, %c0_2] : memref<1x256xf32, #tpu.memory_space<vmem>>, vector<1x256xf32>
    %2 = vector.broadcast %1 : vector<1x256xf32> to vector<2x256xf32>
    %3 = arith.addf %0, %2 : vector<2x256xf32>
    %c0_3 = arith.constant 0 : index
    %c0_4 = arith.constant 0 : index
    %4 = vector.load %arg4[%c0_3, %c0_4] : memref<2x256xf32, #tpu.memory_space<vmem>>, vector<2x256xf32>
    tpu.vector_store %arg4[%c0_3, %c0_4], %3 {strides = array<i32>} : memref<2x256xf32, #tpu.memory_space<vmem>>, vector<2x256xf32>,
    return
  }
  func.func @transform_0(%arg0: i32, %arg1: i32) -> (i32, i32) {
    %c0_i32 = arith.constant 0 : i32
    return %arg0, %arg1 : i32, i32
  }
  func.func @transform_1(%arg0: i32, %arg1: i32) -> (i32, i32) {
    %c0_i32 = arith.constant 0 : i32
    %c0_i32_0 = arith.constant 0 : i32
    return %c0_i32, %arg1 : i32, i32
  }
  func.func @transform_2(%arg0: i32, %arg1: i32) -> (i32, i32) {
    %c0_i32 = arith.constant 0 : i32
    return %arg0, %arg1 : i32, i32
  }
}

</mosaic_0001>

<llo_original>
// kernel: tpu_custom_call.1
$region0: #{tpu_custom_call.1}
  #allocation0 [shape = 'u32[]', space=smem, size = 0x4, offset = 0x4, fixed_abs, tag = 'smem constant byte address 0x4 - core index']
  #allocation1 [shape = 'u32[144,128]{1,0:T(1,128)}', space=vmem, size = 0x12000, scoped, tag = 'internal scratch']
  %s0 = inlined_call_operand.hbm [shape: f32[2,256], index: 0, kind: input, shape index: {}, may-alias: {0,2}]
  %s1 = inlined_call_operand.vmem [shape: f32[1,256], index: 1, kind: input, shape index: {}]
  %s2 = inlined_call_operand.hbm [shape: f32[2,256], index: 2, kind: output, shape index: {}, may-alias: {0,2}]
  %s3 = sld [smem:[#allocation0]]
  $region22: #{tpu_custom_call.1} parent=0
    _
  %s5 = ssub.s32 1, %s3
  %s6 = scalar_select 0, %s5, %s3
  $region1: #{tpu_custom_call.1} parent=0
    #allocation2 [shape = 'u8[2048]{0}', space=vmem, size = 0x800, scoped, tag = 'input window, operand 0, single buffered']
    #allocation3 [shape = 's32[1]{0}', space=sflag, size = 0x4, scoped, tag = 'scoped memory for tpu_custom_call.1']
    #allocation4 [shape = 's32[1]{0}', space=sflag, size = 0x4, scoped, tag = 'scoped memory for tpu_custom_call.1']
    #allocation5 [shape = 'u8[2048]{0}', space=vmem, size = 0x800, scoped, tag = 'output window, operand 0, single buffered']
    %7 = vsyncpa [#allocation3], 0
    %8 = vsyncpa [#allocation4], 0
    // Predicated region
    $region2: #{tpu_custom_call.1} parent=1 // pred_check
      _
    $region3: #{tpu_custom_call.1} parent=1 // pred_check_branch
      %10 = sbr.rel (0) target = $region5
    $region4: #{tpu_custom_call.1} parent=1 // pred_region
      %s12 = ssub.s32 64, 64
      %13 = vsyncadd [#allocation3], %s12
      %s15 = sshll.u32 [#allocation2], 4
      %s16 = int_to_ptr.vmem [resolvable:$true] %s15
      %18 = dma.hbm_to_vmem [thread:$0]  %s0, 64, %s16, [#allocation3]
    $region5: #{tpu_custom_call.1} parent=1 // pred_fallthru
      _
    // Predicated region
    $region6: #{tpu_custom_call.1} parent=1 // pred_check
      _
    $region7: #{tpu_custom_call.1} parent=1 // pred_check_branch
      %20 = sbr.rel (0) target = $region9
    $region8: #{tpu_custom_call.1} parent=1 // pred_region
      _
    $region9: #{tpu_custom_call.1} parent=1 // pred_fallthru
      _
    // Predicated region
    $region10: #{tpu_custom_call.1} parent=1 // pred_check
      _
    $region11: #{tpu_custom_call.1} parent=1 // pred_check_branch
      %22 = sbr.rel (0) target = $region13
    $region12: #{tpu_custom_call.1} parent=1 // pred_region
      %23 = dma.done [#allocation3], 64
    $region13: #{tpu_custom_call.1} parent=1 // pred_fallthru
      _
    %v24 = vld [vmem:[#allocation2] sm:$0xf]
    %v25 = vld [vmem:[%s1] sm:$0x3]
    %v27 = vlaneseq
    %v28 = vshrl.u32 %v27, 7
    %v29 = vsub.s32 0, %v28
    %v30 = vrot.slane %v25, %v29
    %v31 = vlaneseq
    %v32 = vshrl.u32 %v31, 7
    %v33 = vsub.s32 1, %v32
    %v34 = vrot.slane %v25, %v33
    %v35 = vcombine.low %v30, %v34
    %v37 = vunpack.c.l.s4 1983009808
    %v38 = vunpack.c.0.s8 %v37
    %v39 = vlaneseq
    %v40 = vshrl.u32 %v39, 7
    %v41 = vsub.s32 %v38, %v40
    %v42 = vrot.slane %v35, %v41
    %v44 = vadd.f32 %v24, %v42
    %45 = vst [vmem:[#allocation5] sm:$0xf] %v44
    // Predicated region
    $region14: #{tpu_custom_call.1} parent=1 // pred_check
      _
    $region15: #{tpu_custom_call.1} parent=1 // pred_check_branch
      %47 = sbr.rel (0) target = $region17
    $region16: #{tpu_custom_call.1} parent=1 // pred_region
      %s49 = ssub.s32 64, 64
      %50 = vsyncadd [#allocation4], %s49
      %s52 = sshll.u32 [#allocation5], 4
      %s53 = int_to_ptr.vmem [resolvable:$true] %s52
      %55 = dma.vmem_to_hbm [thread:$0]  %s53, 64, %s2, [#allocation4]
    $region17: #{tpu_custom_call.1} parent=1 // pred_fallthru
      _
    // Predicated region
    $region18: #{tpu_custom_call.1} parent=1 // pred_check
      _
    $region19: #{tpu_custom_call.1} parent=1 // pred_check_branch
      %57 = sbr.rel (0) target = $region21
    $region20: #{tpu_custom_call.1} parent=1 // pred_region
      %58 = dma.done [#allocation4], 64
    $region21: #{tpu_custom_call.1} parent=1 // pred_fallthru
      _
    %59 = vsyncpa [#allocation3], 1
    %60 = vsyncpa [#allocation4], 1

</llo_original>
